<compile_context>
chip_gen: v6e
topology: v6e:2x2x1
jax: 0.10.0
libtpu: 0.0.40
codegen_flags: <defaults>
</compile_context>

<pallas_src>
import functools
import math
import re

import jax
import jax.numpy as jnp
from jax.experimental import pallas as pl
from jax.experimental.pallas import tpu as pltpu


# --------------------------------------------------------------------------- #
# Helpers
# --------------------------------------------------------------------------- #
def _gelu_tanh(x):
    # PyTorch nn.GELU(approximate='tanh'):
    # 0.5 * x * (1 + tanh(sqrt(2/pi) * (x + 0.044715 * x^3)))
    c = math.sqrt(2.0 / math.pi)
    return 0.5 * x * (1.0 + jnp.tanh(c * (x + 0.044715 * x * x * x)))


def _round_up(n, m):
    return ((n + m - 1) // m) * m


def _tpu_vmem_and_gen():
    """Physical VMEM bytes per TensorCore and TPU generation (best effort)."""
    gen = None
    try:
        kind = str(jax.devices()[0].device_kind)
        m = re.search(r"(\d+)", kind)
        if m:
            gen = int(m.group(1))
    except Exception:
        gen = None
    vmem = None
    try:
        info = pltpu.get_tpu_info()
        v = getattr(info, "vmem_capacity_bytes", None)
        if v:
            vmem = int(v)
    except Exception:
        vmem = None
    if not vmem or vmem <= 0:
        if gen is not None and gen >= 7:
            vmem = 64 << 20          # v7x: 64 MiB per TC
        elif gen is not None:
            vmem = 128 << 20         # v4/v5e/v6e-class: 128 MiB
        else:
            vmem = 64 << 20          # unknown: be conservative
    return vmem, gen


def _fit_tm(M, target):
    """Row tile: multiple of 16, <= padded M, prefer >= 2 tiles (2 TCs on v7x)."""
    tm = min(target, _round_up(M, 16))
    tm = max(16, (tm // 16) * 16)
    while tm > 16 and (M + tm - 1) // tm < 2:
        tm = max(16, ((tm // 2) // 16) * 16)
    return tm


def _pick_sub(th):
    """In-body hidden sub-chunk width (lane-aligned, <=512)."""
    for c in (512, 256, 128):
        if th % c == 0:
            return c
    return th


def _pick_th_blocked(H, gen):
    """Hidden tile for the streamed-weight fallback. 256-aligned on v6e/v7x."""
    cands = (512, 384, 256) if (gen is not None and gen <= 5) else (512, 256)
    for c in cands:
        if H % c == 0:
            return c
    if H % 128 == 0:
        return 128
    return H


def _pad2(r, c, itemsize):
    """VMEM footprint of an (r, c) buffer incl. sublane/lane tile padding."""
    s = {4: 8, 2: 16, 1: 32}.get(itemsize, 8)
    return _round_up(max(r, 1), s) * _round_up(max(c, 1), 128) * itemsize


def _vmem_bytes(tm, th, sub, C, cbytes, obytes, wbuf):
    w = wbuf * (_pad2(C, th, cbytes) + _pad2(th, C, cbytes))   # weight tiles
    b = 2 * (_pad2(1, th, 4) + _pad2(1, C, 4))                 # padded bias tiles
    xb = 2 * _pad2(tm, C, cbytes)                              # x tile, dbl-buffered
    ob = 2 * _pad2(tm, C, obytes)                              # out tile, dbl-buffered
    acc = _pad2(tm, C, 4)                                      # f32 accumulator scratch
    hbuf = 2 * _pad2(tm, sub, 4)                               # live f32 GELU sub-chunks
    return w + b + xb + ob + acc + hbuf


# --------------------------------------------------------------------------- #
# Kernel
# --------------------------------------------------------------------------- #
def mlp_kernel(x_ref, wfc_ref, bfc_ref, wproj_ref, bproj_ref, o_ref, acc_ref,
               *, sub_width, n_sub):
    # x_ref:     (tm, C)  bf16
    # wfc_ref:   (C, th)  bf16   (th == H when weights are VMEM-resident)
    # bfc_ref:   (1, th)  f32
    # wproj_ref: (th, C)  bf16
    # bproj_ref: (1, C)   f32
    # o_ref:     (tm, C)  out dtype
    # acc_ref:   (tm, C)  f32 VMEM accumulator (resident across the hidden axis)
    j = pl.program_id(1)

    @pl.when(j == 0)
    def _():
        acc_ref[...] = jnp.zeros_like(acc_ref)

    x = x_ref[...]
    # Static sub-chunks along the hidden dim: matmul1 -> GELU -> matmul2-acc per
    # chunk so GELU (VPU/EUP) of one chunk overlaps the MXU work of the next.
    for s in range(n_sub):
        lo = s * sub_width
        hi = lo + sub_width
        h = jnp.dot(x, wfc_ref[:, lo:hi], preferred_element_type=jnp.float32)
        h = _gelu_tanh(h + bfc_ref[:, lo:hi])
        acc_ref[...] += jnp.dot(h.astype(wproj_ref.dtype), wproj_ref[lo:hi, :],
                                preferred_element_type=jnp.float32)

    @pl.when(j == pl.num_programs(1) - 1)
    def _():
        o_ref[...] = (acc_ref[...] + bproj_ref[...]).astype(o_ref.dtype)


# --------------------------------------------------------------------------- #
# Wrapper
# --------------------------------------------------------------------------- #
def mlp_forward(x, w_fc, b_fc, w_proj, b_proj, *, compute_dtype=jnp.bfloat16):
    """x: (B, T, C). w_fc: (C, 4C), b_fc: (4C,), w_proj: (4C, C), b_proj: (C,).

    Weights are stored transposed vs. PyTorch (i.e. (in, out)) so the kernel
    does plain row-major matmuls on the MXU.
    """
    B, T, C = x.shape
    H = w_fc.shape[1]
    assert w_fc.shape == (C, H) and w_proj.shape == (H, C)
    M = B * T

    vmem_cap, gen = _tpu_vmem_and_gen()
    budget = int(0.70 * vmem_cap)            # headroom for Mosaic internals

    cbytes = jnp.dtype(compute_dtype).itemsize
    out_dtype = x.dtype
    obytes = jnp.dtype(out_dtype).itemsize

    # ---- tile / residency selection --------------------------------------
    resident = False
    tm = None
    th = sub = None
    need = 0
    # 1) preferred: both weights fully VMEM-resident -> fetched from HBM once.
    for tm_try in (512, 256, 128, 64, 32, 16):
        tm_c = _fit_tm(M, tm_try)
        sub_c = _pick_sub(H)
        need_c = _vmem_bytes(tm_c, H, sub_c, C, cbytes, obytes, wbuf=2)
        if need_c <= budget:
            resident, tm, th, sub, need = True, tm_c, H, sub_c, need_c
            break
    # 2) fallback: stream weight tiles along the hidden axis with a big tm so
    #    arithmetic intensity (~tm FLOP / weight byte) beats the HBM balance.
    if not resident:
        th = _pick_th_blocked(H, gen)
        sub = _pick_sub(th)
        wbuf = 3 if gen == 5 else 2
        tm_target = {5: 512, 6: 1024, 7: 512}.get(gen, 768)
        for tm_try in (1024, 768, 512, 384, 256, 128, 64, 32, 16):
            if tm_try > tm_target:
                continue
            tm_c = _fit_tm(M, tm_try)
            need_c = _vmem_bytes(tm_c, th, sub, C, cbytes, obytes, wbuf=wbuf)
            if need_c <= budget:
                tm, need = tm_c, need_c
                break
        if tm is None:
            tm = 16
            need = _vmem_bytes(tm, th, sub, C, cbytes, obytes, wbuf=2)

    n_sub = th // sub
    M_pad = _round_up(M, tm)
    grid = (M_pad // tm, H // th)

    # ---- data prep --------------------------------------------------------
    x2d = x.reshape(M, C)
    if M_pad != M:
        x2d = jnp.pad(x2d, ((0, M_pad - M), (0, 0)))
    x2d = x2d.astype(compute_dtype)
    w_fc_c = w_fc.astype(compute_dtype)
    w_proj_c = w_proj.astype(compute_dtype)
    b_fc2 = b_fc.reshape(1, H).astype(jnp.float32)
    b_proj2 = b_proj.reshape(1, C).astype(jnp.float32)

    # ---- BlockSpecs --------------------------------------------------------
    if resident:
        # Constant block indices -> weights DMA'd from HBM exactly once.
        wfc_spec = pl.BlockSpec((C, H), lambda i, j: (0, 0))
        wproj_spec = pl.BlockSpec((H, C), lambda i, j: (0, 0))
        bfc_spec = pl.BlockSpec((1, H), lambda i, j: (0, 0))
    else:
        wkw = {}
        if gen == 5:
            # Extra buffer hides weight-DMA jitter on v5e's slower HBM.
            wkw = dict(pipeline_mode=pl.Buffered(3))
        wfc_spec = pl.BlockSpec((C, th), lambda i, j: (0, j), **wkw)
        wproj_spec = pl.BlockSpec((th, C), lambda i, j: (j, 0), **wkw)
        bfc_spec = pl.BlockSpec((1, th), lambda i, j: (0, j))

    in_specs = [
        pl.BlockSpec((tm, C), lambda i, j: (i, 0)),   # x row tile
        wfc_spec,
        bfc_spec,
        wproj_spec,
        pl.BlockSpec((1, C), lambda i, j: (0, 0)),    # b_proj (resident)
    ]
    out_spec = pl.BlockSpec((tm, C), lambda i, j: (i, 0))

    # ---- VMEM limit & cost estimate ----------------------------------------
    vmem_limit = int(min(max(int(1.25 * need) + (4 << 20), 16 << 20),
                         int(0.75 * vmem_cap)))

    n_row_tiles = M_pad // tm
    w_factor = 1 if resident else n_row_tiles   # weights re-stream per row tile
    cost = pl.CostEstimate(
        flops=4 * M_pad * C * H,                 # two matmuls
        transcendentals=M_pad * H,               # one tanh per hidden activation
        bytes_accessed=int(
            M_pad * C * cbytes                   # x
            + w_factor * (2 * C * H * cbytes + H * 4)   # W_fc+W_proj (+b_fc)
            + C * 4                              # b_proj
            + M_pad * C * obytes),               # out
    )

    kernel = functools.partial(mlp_kernel, sub_width=sub, n_sub=n_sub)

    out = pl.pallas_call(
        kernel,
        out_shape=jax.ShapeDtypeStruct((M_pad, C), out_dtype),
        grid_spec=pltpu.PrefetchScalarGridSpec(
            num_scalar_prefetch=0,
            grid=grid,
            in_specs=in_specs,
            out_specs=out_spec,
            scratch_shapes=[pltpu.VMEM((tm, C), jnp.float32)],
        ),
        compiler_params=pltpu.CompilerParams(
            dimension_semantics=("parallel", "arbitrary"),
            vmem_limit_bytes=vmem_limit,
        ),
        cost_estimate=cost,
    )(x2d, w_fc_c, b_fc2, w_proj_c, b_proj2)

    return out[:M].reshape(B, T, C)


# --------------------------------------------------------------------------- #
# Self-test
# --------------------------------------------------------------------------- #
if __name__ == "__main__":
    # Small nanoGPT-like config: n_embd=32, batch=2, seq=8 -> hidden = 128
    B, T, C = 2, 8, 32
    H = 4 * C

    key = jax.random.PRNGKey(0)
    kx, k1, k2 = jax.random.split(key, 3)

    x = jax.random.normal(kx, (B, T, C), dtype=jnp.float32)

    # GPT-2-style init (std=0.02); weights stored (in, out) = W^T vs PyTorch.
    w_fc = 0.02 * jax.random.normal(k1, (C, H), dtype=jnp.float32)
    b_fc = jnp.zeros((H,), dtype=jnp.float32)
    w_proj = 0.02 * jax.random.normal(k2, (H, C), dtype=jnp.float32)
    b_proj = jnp.zeros((C,), dtype=jnp.float32)

    y = jax.jit(mlp_forward)(x, w_fc, b_fc, w_proj, b_proj)
    jax.block_until_ready(y)

    # Pure-JAX f32 reference (PyTorch MLP semantics). Kernel uses bf16 matmul
    # operands with f32 accumulation -> bf16-appropriate tolerance.
    def ref(xv):
        h = xv @ w_fc + b_fc
        h = 0.5 * h * (1.0 + jnp.tanh(math.sqrt(2.0 / math.pi)
                                      * (h + 0.044715 * h ** 3)))
        return h @ w_proj + b_proj

    y_ref = ref(x)
    assert y.shape == y_ref.shape
    assert bool(jnp.all(jnp.isfinite(y))), "non-finite output"
    max_err = float(jnp.max(jnp.abs(y - y_ref)))
    assert jnp.allclose(y, y_ref, atol=5e-3, rtol=5e-2), (
        f"mismatch vs reference; max abs err = {max_err}")
    print("KERNEL_OK")
</pallas_src>

<mosaic_0001>
module attributes {stable_mosaic.version = 11 : i64} {
  func.func @mlp_kernel(%arg0: i32, %arg1: i32, %arg2: memref<16x32xbf16, #tpu.memory_space<vmem>>, %arg3: memref<32x128xbf16, #tpu.memory_space<vmem>>, %arg4: memref<1x128xf32, #tpu.memory_space<vmem>>, %arg5: memref<128x32xbf16, #tpu.memory_space<vmem>>, %arg6: memref<1x32xf32, #tpu.memory_space<vmem>>, %arg7: memref<16x32xf32, #tpu.memory_space<vmem>>, %arg8: memref<16x32xf32, #tpu.memory_space<vmem>>) attributes {dimension_semantics = [#tpu.dimension_semantics<parallel>, #tpu.dimension_semantics<arbitrary>], iteration_bounds = array<i64: 1, 1>, scalar_prefetch = 0 : i64, scratch_operands = 1 : i64, tpu.core_type = #tpu.core_type<tc>, window_params = [{transform_indices = @transform_0, window_bounds = array<i64: 16, 32>}, {pipeline_mode = #tpu.pipeline_mode<synchronous>, transform_indices = @transform_1, window_bounds = array<i64: 32, 128>}, {pipeline_mode = #tpu.pipeline_mode<synchronous>, transform_indices = @transform_2, window_bounds = array<i64: 1, 128>}, {pipeline_mode = #tpu.pipeline_mode<synchronous>, transform_indices = @transform_3, window_bounds = array<i64: 128, 32>}, {pipeline_mode = #tpu.pipeline_mode<synchronous>, transform_indices = @transform_4, window_bounds = array<i64: 1, 32>}, {transform_indices = @transform_5, window_bounds = array<i64: 16, 32>}]} {
    %c0_i32 = arith.constant 0 : i32
    %0 = arith.cmpi eq, %arg1, %c0_i32 : i32
    %1 = arith.extui %0 : i1 to i32
    %c0_i32_0 = arith.constant 0 : i32
    %2 = arith.cmpi ne, %1, %c0_i32_0 : i32
    scf.if %2 {
      %cst_19 = arith.constant 0.000000e+00 : f32
      %31 = vector.broadcast %cst_19 : f32 to vector<16x32xf32>
      %c0_20 = arith.constant 0 : index
      %c0_21 = arith.constant 0 : index
      %32 = vector.load %arg8[%c0_20, %c0_21] : memref<16x32xf32, #tpu.memory_space<vmem>>, vector<16x32xf32>
      tpu.vector_store %arg8[%c0_20, %c0_21], %31 {strides = array<i32>} : memref<16x32xf32, #tpu.memory_space<vmem>>, vector<16x32xf32>,
    } else {
    }
    %c0 = arith.constant 0 : index
    %c0_1 = arith.constant 0 : index
    %3 = vector.load %arg2[%c0, %c0_1] : memref<16x32xbf16, #tpu.memory_space<vmem>>, vector<16x32xbf16>
    %c0_2 = arith.constant 0 : index
    %c0_3 = arith.constant 0 : index
    %4 = vector.load %arg3[%c0_2, %c0_3] : memref<32x128xbf16, #tpu.memory_space<vmem>>, vector<32x128xbf16>
    %cst = arith.constant dense<0.000000e+00> : vector<16x128xf32>
    %5 = tpu.matmul %3, %4, %cst {dimension_numbers = #tpu.dot_dimension_numbers<[1], [0], [0], [1], [0, 0, 1, 1], [], []>} : vector<16x32xbf16>, vector<32x128xbf16>, vector<16x128xf32> -> vector<16x128xf32>
    %c0_4 = arith.constant 0 : index
    %c0_5 = arith.constant 0 : index
    %6 = vector.load %arg4[%c0_4, %c0_5] : memref<1x128xf32, #tpu.memory_space<vmem>>, vector<1x128xf32>
    %7 = vector.broadcast %6 : vector<1x128xf32> to vector<16x128xf32>
    %8 = arith.addf %5, %7 : vector<16x128xf32>
    %cst_6 = arith.constant 5.000000e-01 : f32
    %9 = vector.broadcast %cst_6 : f32 to vector<16x128xf32>
    %10 = arith.mulf %9, %8 : vector<16x128xf32>
    %cst_7 = arith.constant 4.471500e-02 : f32
    %11 = vector.broadcast %cst_7 : f32 to vector<16x128xf32>
    %12 = arith.mulf %11, %8 : vector<16x128xf32>
    %13 = arith.mulf %12, %8 : vector<16x128xf32>
    %14 = arith.mulf %13, %8 : vector<16x128xf32>
    %15 = arith.addf %8, %14 : vector<16x128xf32>
    %cst_8 = arith.constant 0.797884583 : f32
    %16 = vector.broadcast %cst_8 : f32 to vector<16x128xf32>
    %17 = arith.mulf %16, %15 : vector<16x128xf32>
    %18 = math.tanh %17 : vector<16x128xf32>
    %cst_9 = arith.constant 1.000000e+00 : f32
    %19 = vector.broadcast %cst_9 : f32 to vector<16x128xf32>
    %20 = arith.addf %19, %18 : vector<16x128xf32>
    %21 = arith.mulf %10, %20 : vector<16x128xf32>
    %c0_10 = arith.constant 0 : index
    %c0_11 = arith.constant 0 : index
    %22 = vector.load %arg8[%c0_10, %c0_11] : memref<16x32xf32, #tpu.memory_space<vmem>>, vector<16x32xf32>
    %23 = arith.truncf %21 : vector<16x128xf32> to vector<16x128xbf16>
    %c0_12 = arith.constant 0 : index
    %c0_13 = arith.constant 0 : index
    %24 = vector.load %arg5[%c0_12, %c0_13] : memref<128x32xbf16, #tpu.memory_space<vmem>>, vector<128x32xbf16>
    %cst_14 = arith.constant dense<0.000000e+00> : vector<16x32xf32>
    %25 = tpu.matmul %23, %24, %cst_14 {dimension_numbers = #tpu.dot_dimension_numbers<[1], [0], [0], [1], [0, 0, 1, 1], [], []>} : vector<16x128xbf16>, vector<128x32xbf16>, vector<16x32xf32> -> vector<16x32xf32>
    %26 = arith.addf %22, %25 : vector<16x32xf32>
    %c0_15 = arith.constant 0 : index
    %c0_16 = arith.constant 0 : index
    %27 = vector.load %arg8[%c0_15, %c0_16] : memref<16x32xf32, #tpu.memory_space<vmem>>, vector<16x32xf32>
    tpu.vector_store %arg8[%c0_15, %c0_16], %26 {strides = array<i32>} : memref<16x32xf32, #tpu.memory_space<vmem>>, vector<16x32xf32>,
    %c0_i32_17 = arith.constant 0 : i32
    %28 = arith.cmpi eq, %arg1, %c0_i32_17 : i32
    %29 = arith.extui %28 : i1 to i32
    %c0_i32_18 = arith.constant 0 : i32
    %30 = arith.cmpi ne, %29, %c0_i32_18 : i32
    scf.if %30 {
      %c0_19 = arith.constant 0 : index
      %c0_20 = arith.constant 0 : index
      %31 = vector.load %arg8[%c0_19, %c0_20] : memref<16x32xf32, #tpu.memory_space<vmem>>, vector<16x32xf32>
      %c0_21 = arith.constant 0 : index
      %c0_22 = arith.constant 0 : index
      %32 = vector.load %arg6[%c0_21, %c0_22] : memref<1x32xf32, #tpu.memory_space<vmem>>, vector<1x32xf32>
      %33 = vector.broadcast %32 : vector<1x32xf32> to vector<16x32xf32>
      %34 = arith.addf %31, %33 : vector<16x32xf32>
      %c0_23 = arith.constant 0 : index
      %c0_24 = arith.constant 0 : index
      %35 = vector.load %arg7[%c0_23, %c0_24] : memref<16x32xf32, #tpu.memory_space<vmem>>, vector<16x32xf32>
      tpu.vector_store %arg7[%c0_23, %c0_24], %34 {strides = array<i32>} : memref<16x32xf32, #tpu.memory_space<vmem>>, vector<16x32xf32>,
    } else {
    }
    return
  }
  func.func @transform_0(%arg0: i32, %arg1: i32) -> (i32, i32) {
    %c0_i32 = arith.constant 0 : i32
    %c0_i32_0 = arith.constant 0 : i32
    return %arg0, %c0_i32 : i32, i32
  }
  func.func @transform_1(%arg0: i32, %arg1: i32) -> (i32, i32) {
    %c0_i32 = arith.constant 0 : i32
    %c0_i32_0 = arith.constant 0 : i32
    %c0_i32_1 = arith.constant 0 : i32
    return %c0_i32, %c0_i32_0 : i32, i32
  }
  func.func @transform_2(%arg0: i32, %arg1: i32) -> (i32, i32) {
    %c0_i32 = arith.constant 0 : i32
    %c0_i32_0 = arith.constant 0 : i32
    %c0_i32_1 = arith.constant 0 : i32
    return %c0_i32, %c0_i32_0 : i32, i32
  }
  func.func @transform_3(%arg0: i32, %arg1: i32) -> (i32, i32) {
    %c0_i32 = arith.constant 0 : i32
    %c0_i32_0 = arith.constant 0 : i32
    %c0_i32_1 = arith.constant 0 : i32
    return %c0_i32, %c0_i32_0 : i32, i32
  }
  func.func @transform_4(%arg0: i32, %arg1: i32) -> (i32, i32) {
    %c0_i32 = arith.constant 0 : i32
    %c0_i32_0 = arith.constant 0 : i32
    %c0_i32_1 = arith.constant 0 : i32
    return %c0_i32, %c0_i32_0 : i32, i32
  }
  func.func @transform_5(%arg0: i32, %arg1: i32) -> (i32, i32) {
    %c0_i32 = arith.constant 0 : i32
    %c0_i32_0 = arith.constant 0 : i32
    return %arg0, %c0_i32 : i32, i32
  }
}

</mosaic_0001>

<llo_original>
// kernel: mlp_forward.1
$region0: #{mlp_forward.1}
  #allocation0 [shape = 'u32[]', space=smem, size = 0x4, offset = 0x4, fixed_abs, tag = 'smem constant byte address 0x4 - core index']
  #allocation1 [shape = 'u32[144,128]{1,0:T(1,128)}', space=vmem, size = 0x12000, scoped, tag = 'internal scratch']
  #allocation2 [shape = 'f32[16,32]{1,0:T(8,128)}', space=vmem, size = 0x2000, scoped, tag = 'scratch operand']
  %s0 = inlined_call_operand.vmem [shape: bf16[16,32], index: 0, kind: input, shape index: {}]
  %s1 = inlined_call_operand.vmem [shape: bf16[32,128], index: 1, kind: input, shape index: {}]
  %s2 = inlined_call_operand.vmem [shape: f32[1,128], index: 2, kind: input, shape index: {}]
  %s3 = inlined_call_operand.vmem [shape: bf16[128,32], index: 3, kind: input, shape index: {}]
  %s4 = inlined_call_operand.vmem [shape: f32[1,32], index: 4, kind: input, shape index: {}]
  %s5 = inlined_call_operand.hbm [shape: f32[16,32], index: 5, kind: output, shape index: {}]
  %s6 = sld [smem:[#allocation0]]
  $region38: #{mlp_forward.1} parent=0
    _
  %s8 = ssub.s32 1, %s6
  %s9 = scalar_select 0, %s8, %s6
  $region1: #{mlp_forward.1} parent=0
    #allocation3 [shape = 'u8[8192]{0}', space=vmem, size = 0x2000, scoped, tag = 'output window, operand 0, single buffered']
    #allocation4 [shape = 's32[1]{0}', space=sflag, size = 0x4, scoped, tag = 'scoped memory for mlp_forward.1']
    %10 = vsyncpa [#allocation4], 0
    // Predicated region
    $region2: #{mlp_forward.1} parent=1 // pred_check
      _
    $region3: #{mlp_forward.1} parent=1 // pred_check_branch
      %12 = sbr.rel (0) target = $region5
    $region4: #{mlp_forward.1} parent=1 // pred_region
      _
    $region5: #{mlp_forward.1} parent=1 // pred_fallthru
      _
    // Predicated region
    $region6: #{mlp_forward.1} parent=1 // pred_check
      _
    $region7: #{mlp_forward.1} parent=1 // pred_check_branch
      %14 = sbr.rel (0) target = $region9
    $region8: #{mlp_forward.1} parent=1 // pred_region
      _
    $region9: #{mlp_forward.1} parent=1 // pred_fallthru
      _
    // Predicated region
    $region10: #{mlp_forward.1} parent=1 // pred_check
      _
    $region11: #{mlp_forward.1} parent=1 // pred_check_branch
      %16 = sbr.rel (0) target = $region13
    $region12: #{mlp_forward.1} parent=1 // pred_region
      _
    $region13: #{mlp_forward.1} parent=1 // pred_fallthru
      _
    // Predicated region
    $region14: #{mlp_forward.1} parent=1 // pred_check
      _
    $region15: #{mlp_forward.1} parent=1 // pred_check_branch
      %18 = sbr.rel (0) target = $region17
    $region16: #{mlp_forward.1} parent=1 // pred_region
      _
    $region17: #{mlp_forward.1} parent=1 // pred_fallthru
      _
    // Predicated region
    $region18: #{mlp_forward.1} parent=1 // pred_check
      _
    $region19: #{mlp_forward.1} parent=1 // pred_check_branch
      %20 = sbr.rel (0) target = $region21
    $region20: #{mlp_forward.1} parent=1 // pred_region
      _
    $region21: #{mlp_forward.1} parent=1 // pred_fallthru
      _
    %p22 = scmp.eq.s32.totalorder 0, 0
    // Predicated region
    $region22: #{mlp_forward.1} parent=1 // pred_check
      %p23 = pneg %p22
    $region23: #{mlp_forward.1} parent=1 // pred_check_branch
      %25 = sbr.rel (%p23) target = $region25
    $region24: #{mlp_forward.1} parent=1 // pred_region
      %vm26 = vcmask 261120
      %27 = vst.msk [vmem:[#allocation2] sm:$0xff] %vm26, 0.0
      %28 = vst.msk [vmem:[#allocation2 + $0x8] sm:$0xff] %vm26, 0.0
    $region25: #{mlp_forward.1} parent=1 // pred_fallthru
      _
    %v29 = vld [vmem:[%s0] sm:$0xf]
    %v30 = vld [vmem:[%s0 + $0x4] sm:$0xf]
    %v31 = vld [vmem:[%s1] sm:$0xf]
    %v32 = vld [vmem:[%s1 + $0x4] sm:$0xf]
    %v33 = vld [vmem:[%s1 + $0x8] sm:$0xf]
    %v34 = vld [vmem:[%s1 + $0xc] sm:$0xf]
    %v35 = vld [vmem:[%s2] sm:$0x1]
    %v37 = vlaneseq
    %v38 = vshrl.u32 %v37, 7
    %v39 = vsub.s32 0, %v38
    %v40 = vrot.slane %v35, %v39
    %v44 = vunpack.c.l.b16 %v29
    %v45 = vunpack.c.l.b16 %v30
    %v46 = vpack.c.b16 %v45, %v44
    %v51 = vunpack.c.l.b16 %v31
    %v52 = vunpack.c.l.b16 %v32
    %v53 = vunpack.c.l.b16 %v33
    %v54 = vunpack.c.l.b16 %v34
    %v55 = vpack.c.b16 %v52, %v51
    %v56 = vpack.c.b16 %v54, %v53
    %vm59 = vcmask 261120
    %v61 = vsel %vm59, %v46, 0
    %63 = vmatprep.subr.bf16.mxu0 0
    %64 = vmatpush1.bf16.msra.mxu0 0
    %65 = vmatprep.subr.bf16.mxu0 0
    %66 = vmatpush1.bf16.msra.mxu0 0
    %67 = vmatprep.subr.bf16.mxu0 0
    %68 = vmatpush1.bf16.msra.mxu0 0
    %69 = vmatprep.subr.bf16.mxu0 0
    %70 = vmatpush1.bf16.msra.mxu0 0
    %71 = vmatprep.subr.bf16.mxu0 0
    %72 = vmatpush1.bf16.msra.mxu0 0
    %73 = vmatprep.subr.bf16.mxu0 0
    %74 = vmatpush1.bf16.msra.mxu0 0
    %75 = vmatprep.subr.bf16.mxu0 0
    %76 = vmatpush1.bf16.msra.mxu0 %v56
    %77 = vmatprep.subr.bf16.mxu0 0
    %78 = vmatpush1.bf16.msra.mxu0 %v55
    %79 = vmatprep.subr.bf16.mxu0 0
    %80 = vmatpush2.bf16.msra.mxu0 0
    %81 = vmatprep.subr.bf16.mxu0 0
    %82 = vmatpush2.bf16.msra.mxu0 0
    %83 = vmatprep.subr.bf16.mxu0 0
    %84 = vmatpush2.bf16.msra.mxu0 0
    %85 = vmatprep.subr.bf16.mxu0 0
    %86 = vmatpush2.bf16.msra.mxu0 0
    %87 = vmatprep.subr.bf16.mxu0 0
    %88 = vmatpush2.bf16.msra.mxu0 0
    %89 = vmatprep.subr.bf16.mxu0 0
    %90 = vmatpush2.bf16.msra.mxu0 0
    %91 = vmatprep.subr.bf16.mxu0 0
    %92 = vmatpush2.bf16.msra.mxu0 0
    %93 = vmatprep.subr.bf16.mxu0 0
    %94 = vmatpush2.bf16.msra.mxu0 0
    %95 = vmatprep.mubr.bf16.mxu0 0
    %96 = vmatmul.mubr.bf16.gmra.mxu0 %v61
    %v97 = vpop.f32.mrf.mxu0
    %v98 = vadd.f32 %v40, %v97
    %v99 = vpop.f32.mrf.mxu0
    %v100 = vpop.f32.mrf.mxu0
    %v101 = vadd.f32 %v40, %v100
    %v102 = vpop.f32.mrf.mxu0
    %103 = vdwg.mxu0
    %v104 = vmul.f32 %v98, 0.5
    %v105 = vmul.f32 %v101, 0.5
    %v106 = vmul.f32 %v98, 0.044715
    %v107 = vmul.f32 %v101, 0.044715
    %v108 = vmul.f32 %v106, %v98
    %v109 = vmul.f32 %v107, %v101
    %v110 = vmul.f32 %v108, %v98
    %v111 = vmul.f32 %v109, %v101
    %v112 = vadd.f32 %v98, %v110
    %v113 = vadd.f32 %v101, %v111
    %v114 = vmul.f32 %v112, 0.7978846
    %v115 = vmul.f32 %v113, 0.7978846
    %v116 = vtanh.pop %v114
    %v117 = vtanh.pop %v115
    %v118 = vadd.f32 %v116, 1.0
    %v119 = vadd.f32 %v117, 1.0
    %v120 = vmul.f32 %v104, %v118
    %v121 = vmul.f32 %v105, %v119
    %v122 = vld [vmem:[#allocation2] sm:$0xff]
    %v123 = vld [vmem:[#allocation2 + $0x8] sm:$0xff]
    %v124 = vpack.c.bf16 %v121, %v120
    %v125 = vld [vmem:[%s3] sm:$0xf]
    %v126 = vld [vmem:[%s3 + $0x4] sm:$0xf]
    %v127 = vld [vmem:[%s3 + $0x8] sm:$0xf]
    %v128 = vld [vmem:[%s3 + $0xc] sm:$0xf]
    %v129 = vld [vmem:[%s3 + $0x10] sm:$0xf]
    %v130 = vld [vmem:[%s3 + $0x14] sm:$0xf]
    %v131 = vld [vmem:[%s3 + $0x18] sm:$0xf]
    %v132 = vld [vmem:[%s3 + $0x1c] sm:$0xf]
    %v133 = vld [vmem:[%s3 + $0x20] sm:$0xf]
    %v134 = vld [vmem:[%s3 + $0x24] sm:$0xf]
    %v135 = vld [vmem:[%s3 + $0x28] sm:$0xf]
    %v136 = vld [vmem:[%s3 + $0x2c] sm:$0xf]
    %v137 = vld [vmem:[%s3 + $0x30] sm:$0xf]
    %v138 = vld [vmem:[%s3 + $0x34] sm:$0xf]
    %v139 = vld [vmem:[%s3 + $0x38] sm:$0xf]
    %v140 = vld [vmem:[%s3 + $0x3c] sm:$0xf]
    %v157 = vunpack.c.l.b16 %v125
    %v158 = vunpack.c.l.b16 %v126
    %v159 = vunpack.c.l.b16 %v127
    %v160 = vunpack.c.l.b16 %v128
    %v161 = vunpack.c.l.b16 %v129
    %v162 = vunpack.c.l.b16 %v130
    %v163 = vunpack.c.l.b16 %v131
    %v164 = vunpack.c.l.b16 %v132
    %v165 = vunpack.c.l.b16 %v133
    %v166 = vunpack.c.l.b16 %v134
    %v167 = vunpack.c.l.b16 %v135
    %v168 = vunpack.c.l.b16 %v136
    %v169 = vunpack.c.l.b16 %v137
    %v170 = vunpack.c.l.b16 %v138
    %v171 = vunpack.c.l.b16 %v139
    %v172 = vunpack.c.l.b16 %v140
    %v173 = vpack.c.b16 %v158, %v157
    %v174 = vpack.c.b16 %v160, %v159
    %v175 = vpack.c.b16 %v162, %v161
    %v176 = vpack.c.b16 %v164, %v163
    %v177 = vpack.c.b16 %v166, %v165
    %v178 = vpack.c.b16 %v168, %v167
    %v179 = vpack.c.b16 %v170, %v169
    %v180 = vpack.c.b16 %v172, %v171
    %189 = vmatprep.subr.bf16.mxu0 0
    %190 = vmatpush1.bf16.msra.mxu0 %v180
    %191 = vmatprep.subr.bf16.mxu0 0
    %192 = vmatpush1.bf16.msra.mxu0 %v179
    %193 = vmatprep.subr.bf16.mxu0 0
    %194 = vmatpush1.bf16.msra.mxu0 %v178
    %195 = vmatprep.subr.bf16.mxu0 0
    %196 = vmatpush1.bf16.msra.mxu0 %v177
    %197 = vmatprep.subr.bf16.mxu0 0
    %198 = vmatpush1.bf16.msra.mxu0 %v176
    %199 = vmatprep.subr.bf16.mxu0 0
    %200 = vmatpush1.bf16.msra.mxu0 %v175
    %201 = vmatprep.subr.bf16.mxu0 0
    %202 = vmatpush1.bf16.msra.mxu0 %v174
    %203 = vmatprep.subr.bf16.mxu0 0
    %204 = vmatpush1.bf16.msra.mxu0 %v173
    %205 = vmatprep.subr.bf16.mxu0 0
    %206 = vmatpush2.bf16.msra.mxu0 0
    %207 = vmatprep.subr.bf16.mxu0 0
    %208 = vmatpush2.bf16.msra.mxu0 0
    %209 = vmatprep.subr.bf16.mxu0 0
    %210 = vmatpush2.bf16.msra.mxu0 0
    %211 = vmatprep.subr.bf16.mxu0 0
    %212 = vmatpush2.bf16.msra.mxu0 0
    %213 = vmatprep.subr.bf16.mxu0 0
    %214 = vmatpush2.bf16.msra.mxu0 0
    %215 = vmatprep.subr.bf16.mxu0 0
    %216 = vmatpush2.bf16.msra.mxu0 0
    %217 = vmatprep.subr.bf16.mxu0 0
    %218 = vmatpush2.bf16.msra.mxu0 0
    %219 = vmatprep.subr.bf16.mxu0 0
    %220 = vmatpush2.bf16.msra.mxu0 0
    %221 = vmatprep.mubr.bf16.mxu0 0
    %222 = vmatmul.mubr.bf16.gmra.mxu0 %v124
    %v223 = vpop.f32.mrf.mxu0
    %v224 = vadd.f32 0.0, %v223
    %v225 = vpop.f32.mrf.mxu0
    %v226 = vpop.f32.mrf.mxu0
    %v227 = vadd.f32 0.0, %v226
    %v228 = vpop.f32.mrf.mxu0
    %229 = vdwg.mxu0
    %v230 = vadd.f32 %v122, %v224
    %v231 = vadd.f32 %v123, %v227
    %232 = vst.msk [vmem:[#allocation2] sm:$0xff] %vm59, %v230
    %233 = vst.msk [vmem:[#allocation2 + $0x8] sm:$0xff] %vm59, %v231
    // Predicated region
    $region26: #{mlp_forward.1} parent=1 // pred_check
      %p234 = pneg %p22
    $region27: #{mlp_forward.1} parent=1 // pred_check_branch
      %236 = sbr.rel (%p234) target = $region29
    $region28: #{mlp_forward.1} parent=1 // pred_region
      %v237 = vld [vmem:[#allocation2] sm:$0xff]
      %v238 = vld [vmem:[#allocation2 + $0x8] sm:$0xff]
      %v239 = vld [vmem:[%s4] sm:$0x1]
      %v241 = vlaneseq
      %v242 = vshrl.u32 %v241, 7
      %v243 = vsub.s32 0, %v242
      %v244 = vrot.slane %v239, %v243
      %v246 = vadd.f32 %v237, %v244
      %v247 = vadd.f32 %v238, %v244
      %248 = vst.msk [vmem:[#allocation3] sm:$0xff] %vm59, %v246
      %249 = vst.msk [vmem:[#allocation3 + $0x8] sm:$0xff] %vm59, %v247
    $region29: #{mlp_forward.1} parent=1 // pred_fallthru
      _
    // Predicated region
    $region30: #{mlp_forward.1} parent=1 // pred_check
      _
    $region31: #{mlp_forward.1} parent=1 // pred_check_branch
      %251 = sbr.rel (0) target = $region33
    $region32: #{mlp_forward.1} parent=1 // pred_region
      %s253 = ssub.s32 256, 256
      %254 = vsyncadd [#allocation4], %s253
      %s255 = sshll.u32 [#allocation3], 4
      %s256 = int_to_ptr.vmem [resolvable:$true] %s255
      %261 = dma.vmem_to_hbm [thread:$0]  %s256, 256, %s5, [#allocation4], 128, 128, 8
    $region33: #{mlp_forward.1} parent=1 // pred_fallthru
      _
    // Predicated region
    $region34: #{mlp_forward.1} parent=1 // pred_check
      _
    $region35: #{mlp_forward.1} parent=1 // pred_check_branch
      %263 = sbr.rel (0) target = $region37
    $region36: #{mlp_forward.1} parent=1 // pred_region
      %264 = dma.done [#allocation4], 256
    $region37: #{mlp_forward.1} parent=1 // pred_fallthru
      _
    %265 = vsyncpa [#allocation4], 1

</llo_original>
